<compile_context>
chip_gen: v6e
topology: v6e:2x2x1
jax: 0.10.0
libtpu: 0.0.40
codegen_flags: <defaults>
</compile_context>

<pallas_src>
import jax
import jax.numpy as jnp
from jax.experimental import pallas as pl
from jax.experimental.pallas import tpu as pltpu


# Widest lane first; all are multiples of 128 so stores are unmasked vst.
_LANE_CHOICES = (4096, 2048, 1024, 512, 256, 128)
# ~1M elements per block (4 MiB f32 / 2 MiB bf16): well past the HBM-roofline
# knee; 2x(in) + 2x(out) double buffers stay comfortably inside the 48 MiB
# vmem limit below on every generation (v7x physical VMEM is 64 MiB/TC).
_TARGET_BLOCK_ELEMS = 1024 * 1024
# Aim for at least this many grid steps (when rows allow) so the "parallel"
# grid axis can shard across both v7x TensorCores.
_MIN_GRID_STEPS = 4
_VMEM_LIMIT_BYTES = 48 * 1024 * 1024


def _swish_kernel(x_ref, o_ref):
    # Compute in f32 for portability (v5e has no bf16 VPU/EUP); HBM-bound, so
    # the casts are free filler in the VALU slots.
    # TODO(synk): compute natively in bf16 on v6e/v7x for bf16 inputs to keep
    # the single EUP slot off the critical path at v7x bf16 HBM rates.
    xf = x_ref[...].astype(jnp.float32)
    # swish(x) = x * sigmoid(x) = 0.5 * x * (1 + tanh(x/2)); one EUP push per
    # vreg, no exp(-x) overflow path, exact (no approx reciprocal).
    o_ref[...] = (0.5 * xf * (1.0 + jnp.tanh(0.5 * xf))).astype(o_ref.dtype)


def swish(x):
    """Elementwise swish via Pallas. Accepts any float shape/dtype."""
    orig_shape = x.shape
    orig_dtype = x.dtype
    n = x.size

    # --- Pick a lane-dense 2D layout that avoids padding when possible. ---
    lane = None
    for cand in _LANE_CHOICES:
        if n % cand == 0:
            lane = cand
            break
    if lane is None:
        # Rare ragged case: pad up to a full (8, 128) tile multiple.
        # TODO(synk): run the 128*8-aligned prefix through the kernel and the
        # small tail in plain jnp to avoid the pad/slice HBM round-trips.
        lane = 128
        n_pad = pl.cdiv(n, 8 * lane) * (8 * lane)
    else:
        n_pad = n

    x_flat = x.reshape(-1)
    if n_pad != n:
        # swish(0) == 0, so zero padding is inert; sliced off below.
        x_flat = jnp.pad(x_flat, (0, n_pad - n))

    rows = n_pad // lane
    x2d = x_flat.reshape(rows, lane)

    # --- Block sizing: ~_TARGET_BLOCK_ELEMS per block, sublanes multiple of 8,
    #     but keep >= ~_MIN_GRID_STEPS grid steps so both v7x TCs get work.
    block_rows = max(8, (_TARGET_BLOCK_ELEMS // lane) // 8 * 8)
    if rows > 8:
        cap = max(8, (pl.cdiv(rows, _MIN_GRID_STEPS) // 8) * 8)
        block_rows = min(block_rows, cap)
    if rows <= block_rows:
        block_rows = rows  # single block == full array extent (always legal)
    grid = (pl.cdiv(rows, block_rows),)

    out2d = pl.pallas_call(
        _swish_kernel,
        out_shape=jax.ShapeDtypeStruct((rows, lane), orig_dtype),
        grid_spec=pltpu.PrefetchScalarGridSpec(
            num_scalar_prefetch=0,
            grid=grid,
            in_specs=[pl.BlockSpec((block_rows, lane), lambda i: (i, 0))],
            out_specs=pl.BlockSpec((block_rows, lane), lambda i: (i, 0)),
        ),
        compiler_params=pltpu.CompilerParams(
            dimension_semantics=("parallel",),
            vmem_limit_bytes=_VMEM_LIMIT_BYTES,
        ),
    )(x2d)

    if n_pad != n:
        return out2d.reshape(-1)[:n].reshape(orig_shape)
    return out2d.reshape(orig_shape)


if __name__ == "__main__":
    key = jax.random.PRNGKey(0)

    # NCHW input, matching the PyTorch convention for this repo's blocks.
    x = jax.random.normal(key, (2, 4, 16, 16), dtype=jnp.float32)
    y = swish(x)
    jax.block_until_ready(y)

    y_ref = x * jax.nn.sigmoid(x)
    assert y.shape == x.shape and y.dtype == x.dtype
    assert jnp.allclose(y, y_ref, atol=1e-4, rtol=1e-4)

    # Exercise the ragged (pad) fallback path as well.
    x2 = jax.random.normal(jax.random.PRNGKey(1), (3, 5, 7, 11), dtype=jnp.float32)
    y2 = swish(x2)
    jax.block_until_ready(y2)
    y2_ref = x2 * jax.nn.sigmoid(x2)
    assert y2.shape == x2.shape and y2.dtype == x2.dtype
    assert jnp.allclose(y2, y2_ref, atol=1e-4, rtol=1e-4)

    # A larger, lane-divisible shape to exercise the multi-step grid path.
    x3 = jax.random.normal(jax.random.PRNGKey(2), (8, 32, 32, 32), dtype=jnp.float32)
    y3 = swish(x3)
    jax.block_until_ready(y3)
    y3_ref = x3 * jax.nn.sigmoid(x3)
    assert y3.shape == x3.shape and y3.dtype == x3.dtype
    assert jnp.allclose(y3, y3_ref, atol=1e-4, rtol=1e-4)

    print("KERNEL_OK")
</pallas_src>

<mosaic_0001>
module attributes {stable_mosaic.version = 11 : i64} {
  func.func @_swish_kernel(%arg0: i32, %arg1: memref<1x2048xf32, #tpu.memory_space<vmem>>, %arg2: memref<1x2048xf32, #tpu.memory_space<vmem>>) attributes {dimension_semantics = [#tpu.dimension_semantics<parallel>], iteration_bounds = array<i64: 1>, scalar_prefetch = 0 : i64, scratch_operands = 0 : i64, tpu.core_type = #tpu.core_type<tc>, window_params = [{transform_indices = @transform_0, window_bounds = array<i64: 1, 2048>}, {transform_indices = @transform_1, window_bounds = array<i64: 1, 2048>}]} {
    %c0 = arith.constant 0 : index
    %c0_0 = arith.constant 0 : index
    %0 = vector.load %arg1[%c0, %c0_0] : memref<1x2048xf32, #tpu.memory_space<vmem>>, vector<1x2048xf32>
    %cst = arith.constant 5.000000e-01 : f32
    %1 = vector.broadcast %cst : f32 to vector<1x2048xf32>
    %2 = arith.mulf %1, %0 : vector<1x2048xf32>
    %cst_1 = arith.constant 5.000000e-01 : f32
    %3 = vector.broadcast %cst_1 : f32 to vector<1x2048xf32>
    %4 = arith.mulf %3, %0 : vector<1x2048xf32>
    %5 = math.tanh %4 : vector<1x2048xf32>
    %cst_2 = arith.constant 1.000000e+00 : f32
    %6 = vector.broadcast %cst_2 : f32 to vector<1x2048xf32>
    %7 = arith.addf %6, %5 : vector<1x2048xf32>
    %8 = arith.mulf %2, %7 : vector<1x2048xf32>
    %c0_3 = arith.constant 0 : index
    %c0_4 = arith.constant 0 : index
    %9 = vector.load %arg2[%c0_3, %c0_4] : memref<1x2048xf32, #tpu.memory_space<vmem>>, vector<1x2048xf32>
    tpu.vector_store %arg2[%c0_3, %c0_4], %8 {strides = array<i32>} : memref<1x2048xf32, #tpu.memory_space<vmem>>, vector<1x2048xf32>,
    return
  }
  func.func @transform_0(%arg0: i32) -> (i32, i32) {
    %c0_i32 = arith.constant 0 : i32
    %c0_i32_0 = arith.constant 0 : i32
    return %arg0, %c0_i32 : i32, i32
  }
  func.func @transform_1(%arg0: i32) -> (i32, i32) {
    %c0_i32 = arith.constant 0 : i32
    %c0_i32_0 = arith.constant 0 : i32
    return %arg0, %c0_i32 : i32, i32
  }
}

</mosaic_0001>

<llo_original>
// kernel: tpu_custom_call.1
$region0: #{tpu_custom_call.1}
  #allocation0 [shape = 'u32[]', space=smem, size = 0x4, offset = 0x4, fixed_abs, tag = 'smem constant byte address 0x4 - core index']
  #allocation1 [shape = 'u32[144,128]{1,0:T(1,128)}', space=vmem, size = 0x12000, scoped, tag = 'internal scratch']
  %s0 = inlined_call_operand.hbm [shape: f32[1,2048], index: 0, kind: input, shape index: {}]
  %s1 = inlined_call_operand.hbm [shape: f32[1,2048], index: 1, kind: output, shape index: {}]
  %s2 = sld [smem:[#allocation0]]
  $region18: #{tpu_custom_call.1} parent=0
    _
  %s4 = ssub.s32 1, %s2
  %s5 = scalar_select 0, %s4, %s2
  $region1: #{tpu_custom_call.1} parent=0
    #allocation2 [shape = 'u8[8192]{0}', space=vmem, size = 0x2000, scoped, tag = 'input window, operand 0, single buffered']
    #allocation3 [shape = 's32[1]{0}', space=sflag, size = 0x4, scoped, tag = 'scoped memory for tpu_custom_call.1']
    #allocation4 [shape = 's32[1]{0}', space=sflag, size = 0x4, scoped, tag = 'scoped memory for tpu_custom_call.1']
    #allocation5 [shape = 'u8[8192]{0}', space=vmem, size = 0x2000, scoped, tag = 'output window, operand 0, single buffered']
    %6 = vsyncpa [#allocation3], 0
    %7 = vsyncpa [#allocation4], 0
    // Predicated region
    $region2: #{tpu_custom_call.1} parent=1 // pred_check
      _
    $region3: #{tpu_custom_call.1} parent=1 // pred_check_branch
      %9 = sbr.rel (0) target = $region5
    $region4: #{tpu_custom_call.1} parent=1 // pred_region
      %s11 = ssub.s32 256, 256
      %12 = vsyncadd [#allocation3], %s11
      %s14 = sshll.u32 [#allocation2], 4
      %s15 = int_to_ptr.vmem [resolvable:$true] %s14
      %17 = dma.hbm_to_vmem [thread:$0]  %s0, 256, %s15, [#allocation3]
    $region5: #{tpu_custom_call.1} parent=1 // pred_fallthru
      _
    // Predicated region
    $region6: #{tpu_custom_call.1} parent=1 // pred_check
      _
    $region7: #{tpu_custom_call.1} parent=1 // pred_check_branch
      %19 = sbr.rel (0) target = $region9
    $region8: #{tpu_custom_call.1} parent=1 // pred_region
      %20 = dma.done [#allocation3], 256
    $region9: #{tpu_custom_call.1} parent=1 // pred_fallthru
      _
    %v21 = vld [vmem:[#allocation2] sm:$0xff]
    %v22 = vld [vmem:[#allocation2 + $0x8] sm:$0xff]
    %v23 = vmul.f32 %v21, 0.5
    %v24 = vmul.f32 %v22, 0.5
    %v25 = vtanh.pop %v23
    %v26 = vtanh.pop %v24
    %v27 = vadd.f32 %v25, 1.0
    %v28 = vadd.f32 %v26, 1.0
    %v29 = vmul.f32 %v23, %v27
    %v30 = vmul.f32 %v24, %v28
    %31 = vst [vmem:[#allocation5] sm:$0xff] %v29
    %32 = vst [vmem:[#allocation5 + $0x8] sm:$0xff] %v30
    // Predicated region
    $region10: #{tpu_custom_call.1} parent=1 // pred_check
      _
    $region11: #{tpu_custom_call.1} parent=1 // pred_check_branch
      %34 = sbr.rel (0) target = $region13
    $region12: #{tpu_custom_call.1} parent=1 // pred_region
      %s36 = ssub.s32 256, 256
      %37 = vsyncadd [#allocation4], %s36
      %s39 = sshll.u32 [#allocation5], 4
      %s40 = int_to_ptr.vmem [resolvable:$true] %s39
      %42 = dma.vmem_to_hbm [thread:$0]  %s40, 256, %s1, [#allocation4]
    $region13: #{tpu_custom_call.1} parent=1 // pred_fallthru
      _
    // Predicated region
    $region14: #{tpu_custom_call.1} parent=1 // pred_check
      _
    $region15: #{tpu_custom_call.1} parent=1 // pred_check_branch
      %44 = sbr.rel (0) target = $region17
    $region16: #{tpu_custom_call.1} parent=1 // pred_region
      %45 = dma.done [#allocation4], 256
    $region17: #{tpu_custom_call.1} parent=1 // pred_fallthru
      _
    %46 = vsyncpa [#allocation3], 1
    %47 = vsyncpa [#allocation4], 1

</llo_original>
